<compile_context>
chip_gen: v5e
topology: v5e:2x2
jax: 0.10.0
libtpu: 0.0.40
codegen_flags: <defaults>
</compile_context>

<pallas_src>
import jax
import jax.numpy as jnp
from jax.experimental import pallas as pl
from jax.experimental.pallas import tpu as pltpu

# ---- small, deterministic problem sizes -------------------------------------
B, T, D = 2, 8, 32          # batch, time, model size
H = 4                       # attention heads
DK = D // H                 # head dim
DFF = 64                    # feed-forward hidden size
EPS = 1e-12                 # espnet LayerNorm eps
BT = B * T

LANE = 128                  # lane-tile width used for packing
VO_OFF = LANE               # column offset of the fused V@Wo block in the weight slab
WATT_W = LANE + H * D       # packed attention slab width: [q|k|pad | vo_0..vo_{H-1}]
assert 2 * D <= LANE and H * D <= LANE


def _layernorm(x, g, b):
    mean = jnp.mean(x, axis=-1, keepdims=True)
    var = jnp.mean((x - mean) ** 2, axis=-1, keepdims=True)
    return (x - mean) * jax.lax.rsqrt(var + EPS) * g + b


def encoder_layer_kernel(x_ref, mult_ref, watt_ref, wffn_ref, vec_ref, out_ref):
    x = x_ref[...]                        # (BT, D)
    mult = mult_ref[...]                  # (BT, BT) 0/1: same-batch AND key-valid
    bias = (mult - 1.0) * 1e9             # additive mask, hoisted out of the head loop

    b_att = vec_ref[0:1, :]               # (1, WATT_W) fused projection bias row
    ln1g = vec_ref[1:2, 0:D]
    ln1b = vec_ref[2:3, 0:D]
    ln2g = vec_ref[3:4, 0:D]
    ln2b = vec_ref[4:5, 0:D]
    bo   = vec_ref[5:6, 0:D]
    b1   = vec_ref[6:7, 0:DFF]
    b2   = vec_ref[7:8, 0:D]

    # --- self-attention block (normalize_before=True) -------------------------
    y = _layernorm(x, ln1g, ln1b)
    # one fused matmul: columns [0:D)=Q*scale, [D:2D)=K, [VO_OFF+h*D : VO_OFF+(h+1)*D)=V_h@Wo_h
    proj = jnp.dot(y, watt_ref[...], preferred_element_type=jnp.float32) + b_att

    att = jnp.zeros((BT, D), jnp.float32)
    for h in range(H):                    # static head loop (no lane concat, no separate Wo)
        qh = proj[:, h * DK:(h + 1) * DK]                         # (BT, DK), scale folded in
        kh = proj[:, D + h * DK:D + (h + 1) * DK]                 # (BT, DK)
        voh = proj[:, VO_OFF + h * D:VO_OFF + (h + 1) * D]        # (BT, D) = V_h @ Wo_h
        s = jax.lax.dot_general(qh, kh, (((1,), (1,)), ((), ())),
                                preferred_element_type=jnp.float32)  # (BT, BT)
        s = s + bias                                              # kill pad keys & cross-batch
        m = jnp.max(s, axis=-1, keepdims=True)
        e = jnp.exp(s - m)
        p = e * pl.reciprocal(jnp.sum(e, axis=-1, keepdims=True), approx=True)
        p = p * mult                      # espnet zeroes masked attention weights exactly
        att = att + jnp.dot(p, voh, preferred_element_type=jnp.float32)
    x1 = x + att + bo                     # dropout is identity

    # --- feed-forward block ----------------------------------------------------
    y2 = _layernorm(x1, ln2g, ln2b)
    h1 = jnp.maximum(
        jnp.dot(y2, wffn_ref[0], preferred_element_type=jnp.float32) + b1, 0.0)
    ff = jax.lax.dot_general(h1, wffn_ref[1], (((1,), (1,)), ((), ())),
                             preferred_element_type=jnp.float32) + b2   # wffn[1] = W2^T

    out_ref[...] = (x1 + ff).astype(out_ref.dtype)


def pack_inputs(x, mask, params):
    """Pack 16 tiny parameter arrays + mask into a few lane-dense slabs."""
    (wq, bq, wk, bk, wv, bv, wo, bo,
     ln1g, ln1b, ln2g, ln2b, w1, b1, w2, b2) = params
    scale = 1.0 / jnp.sqrt(jnp.float32(DK))

    # fold the softmax scale into Q, and fold Wo (and bv) into V per head
    wvo = jnp.concatenate(
        [wv[:, h * DK:(h + 1) * DK] @ wo[h * DK:(h + 1) * DK, :] for h in range(H)],
        axis=1)                                                   # (D, H*D)
    bvo = jnp.concatenate(
        [bv[:, h * DK:(h + 1) * DK] @ wo[h * DK:(h + 1) * DK, :] for h in range(H)],
        axis=1)                                                   # (1, H*D)
    pad_w = jnp.zeros((D, LANE - 2 * D), jnp.float32)
    pad_b = jnp.zeros((1, LANE - 2 * D), jnp.float32)
    w_att = jnp.concatenate([wq * scale, wk, pad_w, wvo], axis=1)  # (D, WATT_W)
    b_att = jnp.concatenate([bq * scale, bk, pad_b, bvo], axis=1)  # (1, WATT_W)

    def row(v):
        return jnp.pad(v, ((0, 0), (0, WATT_W - v.shape[1])))
    vec_pack = jnp.concatenate(
        [b_att, row(ln1g), row(ln1b), row(ln2g), row(ln2b),
         row(bo), row(b1), row(b2)], axis=0)                      # (8, WATT_W)

    w_ffn = jnp.stack([w1, w2.T], axis=0)                         # (2, D, DFF)

    # (BT, BT) multiplicative mask: 1 iff query/key in the same batch AND key is valid.
    m = mask[:, 0, :]                                             # (B, T)
    eye = jnp.eye(B, dtype=jnp.float32)                           # (Bq, Bk)
    mult = eye[:, :, None] * m[None, :, :]                        # (Bq, Bk, Tk)
    mult = jnp.broadcast_to(mult[:, None, :, :], (B, T, B, T)).reshape(BT, BT)

    x_flat = x.reshape(BT, D)
    return x_flat, mult, w_att, w_ffn, vec_pack


def encoder_layer(x, mask, params):
    """x: (B, T, D) f32, mask: (B, 1, T) f32. Returns (B, T, D) f32."""
    b_, t_, d_ = x.shape
    inputs = pack_inputs(x, mask, params)

    def fullspec(a):
        nd = a.ndim
        return pl.BlockSpec(a.shape, lambda i, _nd=nd: (0,) * _nd)

    out_flat = pl.pallas_call(
        encoder_layer_kernel,
        out_shape=jax.ShapeDtypeStruct((b_ * t_, d_), jnp.float32),
        grid_spec=pltpu.PrefetchScalarGridSpec(
            num_scalar_prefetch=0,
            grid=(1,),
            in_specs=[fullspec(a) for a in inputs],
            out_specs=pl.BlockSpec((b_ * t_, d_), lambda i: (0, 0)),
        ),
        compiler_params=pltpu.CompilerParams(
            dimension_semantics=("arbitrary",)),
    )(*inputs)
    return out_flat.reshape(b_, t_, d_)


# ---- pure-JAX reference (for a sanity check) ---------------------------------
def encoder_layer_ref(x, mask, params):
    (wq, bq, wk, bk, wv, bv, wo, bo,
     ln1g, ln1b, ln2g, ln2b, w1, b1, w2, b2) = params
    residual = x
    y = _layernorm(x, ln1g, ln1b)
    q = y @ wq + bq
    k = y @ wk + bk
    v = y @ wv + bv
    qh = q.reshape(B, T, H, DK).transpose(0, 2, 1, 3)
    kh = k.reshape(B, T, H, DK).transpose(0, 2, 1, 3)
    vh = v.reshape(B, T, H, DK).transpose(0, 2, 1, 3)
    s = jnp.einsum("bhqd,bhkd->bhqk", qh, kh) / jnp.sqrt(jnp.float32(DK))
    m = mask[:, None, :, :]  # (B,1,1,T)
    s = jnp.where(m > 0, s, -1e9)
    p = jax.nn.softmax(s, axis=-1)
    p = jnp.where(m > 0, p, 0.0)
    ctx = jnp.einsum("bhqk,bhkd->bhqd", p, vh).transpose(0, 2, 1, 3).reshape(B, T, D)
    att = ctx @ wo + bo
    x1 = residual + att
    y2 = _layernorm(x1, ln2g, ln2b)
    ff = jnp.maximum(y2 @ w1 + b1, 0.0) @ w2 + b2
    return x1 + ff


def make_params(key):
    ks = jax.random.split(key, 8)
    scale = 0.05
    wq = jax.random.normal(ks[0], (D, D), jnp.float32) * scale
    wk = jax.random.normal(ks[1], (D, D), jnp.float32) * scale
    wv = jax.random.normal(ks[2], (D, D), jnp.float32) * scale
    wo = jax.random.normal(ks[3], (D, D), jnp.float32) * scale
    bq = jnp.zeros((1, D), jnp.float32)
    bk = jnp.zeros((1, D), jnp.float32)
    bv = jnp.zeros((1, D), jnp.float32)
    bo = jnp.zeros((1, D), jnp.float32)
    ln1g = jnp.ones((1, D), jnp.float32)
    ln1b = jnp.zeros((1, D), jnp.float32)
    ln2g = jnp.ones((1, D), jnp.float32)
    ln2b = jnp.zeros((1, D), jnp.float32)
    w1 = jax.random.normal(ks[4], (D, DFF), jnp.float32) * scale
    b1 = jax.random.normal(ks[5], (1, DFF), jnp.float32) * scale
    w2 = jax.random.normal(ks[6], (DFF, D), jnp.float32) * scale
    b2 = jax.random.normal(ks[7], (1, D), jnp.float32) * scale
    return (wq, bq, wk, bk, wv, bv, wo, bo,
            ln1g, ln1b, ln2g, ln2b, w1, b1, w2, b2)


if __name__ == "__main__":
    key = jax.random.PRNGKey(0)
    kx, kp = jax.random.split(key)
    x = jax.random.normal(kx, (B, T, D), jnp.float32)
    # mask: first batch fully valid, second batch has last 2 frames padded
    mask = jnp.ones((B, 1, T), jnp.float32)
    mask = mask.at[1, 0, T - 2:].set(0.0)
    params = make_params(kp)

    out = encoder_layer(x, mask, params)
    out = jax.block_until_ready(out)

    ref = encoder_layer_ref(x, mask, params)
    assert out.shape == (B, T, D)
    # tolerance relaxed slightly for the approx (EUP) softmax reciprocal
    assert jnp.allclose(out, ref, atol=2e-3, rtol=2e-3), "mismatch vs JAX reference"

    # TODO(synk): cache/chunk streaming path, dropout RNG and concat_after branch not implemented
    # (eval semantics, module defaults only).
    print("KERNEL_OK")
</pallas_src>

<mosaic_0001>
module attributes {stable_mosaic.version = 11 : i64} {
  func.func @encoder_layer_kernel(%arg0: i32, %arg1: memref<16x32xf32, #tpu.memory_space<vmem>>, %arg2: memref<16x16xf32, #tpu.memory_space<vmem>>, %arg3: memref<32x256xf32, #tpu.memory_space<vmem>>, %arg4: memref<2x32x64xf32, #tpu.memory_space<vmem>>, %arg5: memref<8x256xf32, #tpu.memory_space<vmem>>, %arg6: memref<16x32xf32, #tpu.memory_space<vmem>>) attributes {dimension_semantics = [#tpu.dimension_semantics<arbitrary>], iteration_bounds = array<i64: 1>, scalar_prefetch = 0 : i64, scratch_operands = 0 : i64, tpu.core_type = #tpu.core_type<tc>, window_params = [{pipeline_mode = #tpu.pipeline_mode<synchronous>, transform_indices = @transform_0, window_bounds = array<i64: 16, 32>}, {pipeline_mode = #tpu.pipeline_mode<synchronous>, transform_indices = @transform_1, window_bounds = array<i64: 16, 16>}, {pipeline_mode = #tpu.pipeline_mode<synchronous>, transform_indices = @transform_2, window_bounds = array<i64: 32, 256>}, {pipeline_mode = #tpu.pipeline_mode<synchronous>, transform_indices = @transform_3, window_bounds = array<i64: 2, 32, 64>}, {pipeline_mode = #tpu.pipeline_mode<synchronous>, transform_indices = @transform_4, window_bounds = array<i64: 8, 256>}, {pipeline_mode = #tpu.pipeline_mode<synchronous>, transform_indices = @transform_5, window_bounds = array<i64: 16, 32>}]} {
    %c0 = arith.constant 0 : index
    %c0_0 = arith.constant 0 : index
    %0 = vector.load %arg1[%c0, %c0_0] : memref<16x32xf32, #tpu.memory_space<vmem>>, vector<16x32xf32>
    %c0_1 = arith.constant 0 : index
    %c0_2 = arith.constant 0 : index
    %1 = vector.load %arg2[%c0_1, %c0_2] : memref<16x16xf32, #tpu.memory_space<vmem>>, vector<16x16xf32>
    %cst = arith.constant 1.000000e+00 : f32
    %2 = vector.broadcast %cst : f32 to vector<16x16xf32>
    %3 = arith.subf %1, %2 : vector<16x16xf32>
    %cst_3 = arith.constant 1.000000e+09 : f32
    %4 = vector.broadcast %cst_3 : f32 to vector<16x16xf32>
    %5 = arith.mulf %3, %4 : vector<16x16xf32>
    %c0_4 = arith.constant 0 : index
    %c0_5 = arith.constant 0 : index
    %6 = vector.load %arg5[%c0_4, %c0_5] : memref<8x256xf32, #tpu.memory_space<vmem>>, vector<1x256xf32>
    %c1 = arith.constant 1 : index
    %c0_6 = arith.constant 0 : index
    %7 = vector.load %arg5[%c1, %c0_6] : memref<8x256xf32, #tpu.memory_space<vmem>>, vector<1x32xf32>
    %c2 = arith.constant 2 : index
    %c0_7 = arith.constant 0 : index
    %8 = vector.load %arg5[%c2, %c0_7] : memref<8x256xf32, #tpu.memory_space<vmem>>, vector<1x32xf32>
    %c3 = arith.constant 3 : index
    %c0_8 = arith.constant 0 : index
    %9 = vector.load %arg5[%c3, %c0_8] : memref<8x256xf32, #tpu.memory_space<vmem>>, vector<1x32xf32>
    %c4 = arith.constant 4 : index
    %c0_9 = arith.constant 0 : index
    %10 = vector.load %arg5[%c4, %c0_9] : memref<8x256xf32, #tpu.memory_space<vmem>>, vector<1x32xf32>
    %c5 = arith.constant 5 : index
    %c0_10 = arith.constant 0 : index
    %11 = vector.load %arg5[%c5, %c0_10] : memref<8x256xf32, #tpu.memory_space<vmem>>, vector<1x32xf32>
    %c6 = arith.constant 6 : index
    %c0_11 = arith.constant 0 : index
    %12 = vector.load %arg5[%c6, %c0_11] : memref<8x256xf32, #tpu.memory_space<vmem>>, vector<1x64xf32>
    %c7 = arith.constant 7 : index
    %c0_12 = arith.constant 0 : index
    %13 = vector.load %arg5[%c7, %c0_12] : memref<8x256xf32, #tpu.memory_space<vmem>>, vector<1x32xf32>
    %cst_13 = arith.constant dense<0.000000e+00> : vector<16xf32>
    %14 = vector.multi_reduction <add>, %0, %cst_13 [1] : vector<16x32xf32> to vector<16xf32>
    %15 = vector.shape_cast %14 : vector<16xf32> to vector<16x1xf32>
    %cst_14 = arith.constant 3.200000e+01 : f32
    %16 = vector.broadcast %cst_14 : f32 to vector<16x1xf32>
    %17 = arith.divf %15, %16 : vector<16x1xf32>
    %18 = vector.broadcast %17 : vector<16x1xf32> to vector<16x32xf32>
    %19 = arith.subf %0, %18 : vector<16x32xf32>
    %20 = arith.mulf %19, %19 : vector<16x32xf32>
    %cst_15 = arith.constant dense<0.000000e+00> : vector<16xf32>
    %21 = vector.multi_reduction <add>, %20, %cst_15 [1] : vector<16x32xf32> to vector<16xf32>
    %22 = vector.shape_cast %21 : vector<16xf32> to vector<16x1xf32>
    %cst_16 = arith.constant 3.200000e+01 : f32
    %23 = vector.broadcast %cst_16 : f32 to vector<16x1xf32>
    %24 = arith.divf %22, %23 : vector<16x1xf32>
    %25 = vector.broadcast %17 : vector<16x1xf32> to vector<16x32xf32>
    %26 = arith.subf %0, %25 : vector<16x32xf32>
    %cst_17 = arith.constant 9.99999996E-13 : f32
    %27 = vector.broadcast %cst_17 : f32 to vector<16x1xf32>
    %28 = arith.addf %24, %27 : vector<16x1xf32>
    %29 = math.rsqrt %28 : vector<16x1xf32>
    %30 = vector.broadcast %29 : vector<16x1xf32> to vector<16x32xf32>
    %31 = arith.mulf %26, %30 : vector<16x32xf32>
    %32 = vector.broadcast %7 : vector<1x32xf32> to vector<16x32xf32>
    %33 = arith.mulf %31, %32 : vector<16x32xf32>
    %34 = vector.broadcast %8 : vector<1x32xf32> to vector<16x32xf32>
    %35 = arith.addf %33, %34 : vector<16x32xf32>
    %c0_18 = arith.constant 0 : index
    %c0_19 = arith.constant 0 : index
    %36 = vector.load %arg3[%c0_18, %c0_19] : memref<32x256xf32, #tpu.memory_space<vmem>>, vector<32x256xf32>
    %cst_20 = arith.constant dense<0.000000e+00> : vector<16x256xf32>
    %37 = tpu.matmul %35, %36, %cst_20 {dimension_numbers = #tpu.dot_dimension_numbers<[1], [0], [0], [1], [0, 0, 1, 1], [], []>} : vector<16x32xf32>, vector<32x256xf32>, vector<16x256xf32> -> vector<16x256xf32>
    %38 = vector.broadcast %6 : vector<1x256xf32> to vector<16x256xf32>
    %39 = arith.addf %37, %38 : vector<16x256xf32>
    %cst_21 = arith.constant 0.000000e+00 : f32
    %40 = vector.broadcast %cst_21 : f32 to vector<16x32xf32>
    %41 = vector.extract_strided_slice %39 {offsets = [0, 0], sizes = [16, 8], strides = [1, 1]} : vector<16x256xf32> to vector<16x8xf32>
    %42 = vector.extract_strided_slice %39 {offsets = [0, 32], sizes = [16, 8], strides = [1, 1]} : vector<16x256xf32> to vector<16x8xf32>
    %43 = vector.extract_strided_slice %39 {offsets = [0, 128], sizes = [16, 32], strides = [1, 1]} : vector<16x256xf32> to vector<16x32xf32>
    %cst_22 = arith.constant dense<0.000000e+00> : vector<16x16xf32>
    %44 = tpu.matmul %41, %42, %cst_22 {dimension_numbers = #tpu.dot_dimension_numbers<[1], [1], [0], [0], [0, 0, 1, 0], [], []>} : vector<16x8xf32>, vector<16x8xf32>, vector<16x16xf32> -> vector<16x16xf32>
    %45 = arith.addf %44, %5 : vector<16x16xf32>
    %cst_23 = arith.constant dense<0xFF800000> : vector<16xf32>
    %46 = vector.multi_reduction <maximumf>, %45, %cst_23 [1] : vector<16x16xf32> to vector<16xf32>
    %47 = vector.shape_cast %46 : vector<16xf32> to vector<16x1xf32>
    %48 = vector.broadcast %47 : vector<16x1xf32> to vector<16x16xf32>
    %49 = arith.subf %45, %48 : vector<16x16xf32>
    %50 = math.exp %49 : vector<16x16xf32>
    %cst_24 = arith.constant dense<0.000000e+00> : vector<16xf32>
    %51 = vector.multi_reduction <add>, %50, %cst_24 [1] : vector<16x16xf32> to vector<16xf32>
    %52 = vector.shape_cast %51 : vector<16xf32> to vector<16x1xf32>
    %53 = tpu.reciprocal %52 {approx = true} : vector<16x1xf32> -> vector<16x1xf32>
    %54 = vector.broadcast %53 : vector<16x1xf32> to vector<16x16xf32>
    %55 = arith.mulf %50, %54 : vector<16x16xf32>
    %56 = arith.mulf %55, %1 : vector<16x16xf32>
    %cst_25 = arith.constant dense<0.000000e+00> : vector<16x32xf32>
    %57 = tpu.matmul %56, %43, %cst_25 {dimension_numbers = #tpu.dot_dimension_numbers<[1], [0], [0], [1], [0, 0, 1, 1], [], []>} : vector<16x16xf32>, vector<16x32xf32>, vector<16x32xf32> -> vector<16x32xf32>
    %58 = arith.addf %40, %57 : vector<16x32xf32>
    %59 = vector.extract_strided_slice %39 {offsets = [0, 8], sizes = [16, 8], strides = [1, 1]} : vector<16x256xf32> to vector<16x8xf32>
    %60 = vector.extract_strided_slice %39 {offsets = [0, 40], sizes = [16, 8], strides = [1, 1]} : vector<16x256xf32> to vector<16x8xf32>
    %61 = vector.extract_strided_slice %39 {offsets = [0, 160], sizes = [16, 32], strides = [1, 1]} : vector<16x256xf32> to vector<16x32xf32>
    %cst_26 = arith.constant dense<0.000000e+00> : vector<16x16xf32>
    %62 = tpu.matmul %59, %60, %cst_26 {dimension_numbers = #tpu.dot_dimension_numbers<[1], [1], [0], [0], [0, 0, 1, 0], [], []>} : vector<16x8xf32>, vector<16x8xf32>, vector<16x16xf32> -> vector<16x16xf32>
    %63 = arith.addf %62, %5 : vector<16x16xf32>
    %cst_27 = arith.constant dense<0xFF800000> : vector<16xf32>
    %64 = vector.multi_reduction <maximumf>, %63, %cst_27 [1] : vector<16x16xf32> to vector<16xf32>
    %65 = vector.shape_cast %64 : vector<16xf32> to vector<16x1xf32>
    %66 = vector.broadcast %65 : vector<16x1xf32> to vector<16x16xf32>
    %67 = arith.subf %63, %66 : vector<16x16xf32>
    %68 = math.exp %67 : vector<16x16xf32>
    %cst_28 = arith.constant dense<0.000000e+00> : vector<16xf32>
    %69 = vector.multi_reduction <add>, %68, %cst_28 [1] : vector<16x16xf32> to vector<16xf32>
    %70 = vector.shape_cast %69 : vector<16xf32> to vector<16x1xf32>
    %71 = tpu.reciprocal %70 {approx = true} : vector<16x1xf32> -> vector<16x1xf32>
    %72 = vector.broadcast %71 : vector<16x1xf32> to vector<16x16xf32>
    %73 = arith.mulf %68, %72 : vector<16x16xf32>
    %74 = arith.mulf %73, %1 : vector<16x16xf32>
    %cst_29 = arith.constant dense<0.000000e+00> : vector<16x32xf32>
    %75 = tpu.matmul %74, %61, %cst_29 {dimension_numbers = #tpu.dot_dimension_numbers<[1], [0], [0], [1], [0, 0, 1, 1], [], []>} : vector<16x16xf32>, vector<16x32xf32>, vector<16x32xf32> -> vector<16x32xf32>
    %76 = arith.addf %58, %75 : vector<16x32xf32>
    %77 = vector.extract_strided_slice %39 {offsets = [0, 16], sizes = [16, 8], strides = [1, 1]} : vector<16x256xf32> to vector<16x8xf32>
    %78 = vector.extract_strided_slice %39 {offsets = [0, 48], sizes = [16, 8], strides = [1, 1]} : vector<16x256xf32> to vector<16x8xf32>
    %79 = vector.extract_strided_slice %39 {offsets = [0, 192], sizes = [16, 32], strides = [1, 1]} : vector<16x256xf32> to vector<16x32xf32>
    %cst_30 = arith.constant dense<0.000000e+00> : vector<16x16xf32>
    %80 = tpu.matmul %77, %78, %cst_30 {dimension_numbers = #tpu.dot_dimension_numbers<[1], [1], [0], [0], [0, 0, 1, 0], [], []>} : vector<16x8xf32>, vector<16x8xf32>, vector<16x16xf32> -> vector<16x16xf32>
    %81 = arith.addf %80, %5 : vector<16x16xf32>
    %cst_31 = arith.constant dense<0xFF800000> : vector<16xf32>
    %82 = vector.multi_reduction <maximumf>, %81, %cst_31 [1] : vector<16x16xf32> to vector<16xf32>
    %83 = vector.shape_cast %82 : vector<16xf32> to vector<16x1xf32>
    %84 = vector.broadcast %83 : vector<16x1xf32> to vector<16x16xf32>
    %85 = arith.subf %81, %84 : vector<16x16xf32>
    %86 = math.exp %85 : vector<16x16xf32>
    %cst_32 = arith.constant dense<0.000000e+00> : vector<16xf32>
    %87 = vector.multi_reduction <add>, %86, %cst_32 [1] : vector<16x16xf32> to vector<16xf32>
    %88 = vector.shape_cast %87 : vector<16xf32> to vector<16x1xf32>
    %89 = tpu.reciprocal %88 {approx = true} : vector<16x1xf32> -> vector<16x1xf32>
    %90 = vector.broadcast %89 : vector<16x1xf32> to vector<16x16xf32>
    %91 = arith.mulf %86, %90 : vector<16x16xf32>
    %92 = arith.mulf %91, %1 : vector<16x16xf32>
    %cst_33 = arith.constant dense<0.000000e+00> : vector<16x32xf32>
    %93 = tpu.matmul %92, %79, %cst_33 {dimension_numbers = #tpu.dot_dimension_numbers<[1], [0], [0], [1], [0, 0, 1, 1], [], []>} : vector<16x16xf32>, vector<16x32xf32>, vector<16x32xf32> -> vector<16x32xf32>
    %94 = arith.addf %76, %93 : vector<16x32xf32>
    %95 = vector.extract_strided_slice %39 {offsets = [0, 24], sizes = [16, 8], strides = [1, 1]} : vector<16x256xf32> to vector<16x8xf32>
    %96 = vector.extract_strided_slice %39 {offsets = [0, 56], sizes = [16, 8], strides = [1, 1]} : vector<16x256xf32> to vector<16x8xf32>
    %97 = vector.extract_strided_slice %39 {offsets = [0, 224], sizes = [16, 32], strides = [1, 1]} : vector<16x256xf32> to vector<16x32xf32>
    %cst_34 = arith.constant dense<0.000000e+00> : vector<16x16xf32>
    %98 = tpu.matmul %95, %96, %cst_34 {dimension_numbers = #tpu.dot_dimension_numbers<[1], [1], [0], [0], [0, 0, 1, 0], [], []>} : vector<16x8xf32>, vector<16x8xf32>, vector<16x16xf32> -> vector<16x16xf32>
    %99 = arith.addf %98, %5 : vector<16x16xf32>
    %cst_35 = arith.constant dense<0xFF800000> : vector<16xf32>
    %100 = vector.multi_reduction <maximumf>, %99, %cst_35 [1] : vector<16x16xf32> to vector<16xf32>
    %101 = vector.shape_cast %100 : vector<16xf32> to vector<16x1xf32>
    %102 = vector.broadcast %101 : vector<16x1xf32> to vector<16x16xf32>
    %103 = arith.subf %99, %102 : vector<16x16xf32>
    %104 = math.exp %103 : vector<16x16xf32>
    %cst_36 = arith.constant dense<0.000000e+00> : vector<16xf32>
    %105 = vector.multi_reduction <add>, %104, %cst_36 [1] : vector<16x16xf32> to vector<16xf32>
    %106 = vector.shape_cast %105 : vector<16xf32> to vector<16x1xf32>
    %107 = tpu.reciprocal %106 {approx = true} : vector<16x1xf32> -> vector<16x1xf32>
    %108 = vector.broadcast %107 : vector<16x1xf32> to vector<16x16xf32>
    %109 = arith.mulf %104, %108 : vector<16x16xf32>
    %110 = arith.mulf %109, %1 : vector<16x16xf32>
    %cst_37 = arith.constant dense<0.000000e+00> : vector<16x32xf32>
    %111 = tpu.matmul %110, %97, %cst_37 {dimension_numbers = #tpu.dot_dimension_numbers<[1], [0], [0], [1], [0, 0, 1, 1], [], []>} : vector<16x16xf32>, vector<16x32xf32>, vector<16x32xf32> -> vector<16x32xf32>
    %112 = arith.addf %94, %111 : vector<16x32xf32>
    %113 = arith.addf %0, %112 : vector<16x32xf32>
    %114 = vector.broadcast %11 : vector<1x32xf32> to vector<16x32xf32>
    %115 = arith.addf %113, %114 : vector<16x32xf32>
    %cst_38 = arith.constant dense<0.000000e+00> : vector<16xf32>
    %116 = vector.multi_reduction <add>, %115, %cst_38 [1] : vector<16x32xf32> to vector<16xf32>
    %117 = vector.shape_cast %116 : vector<16xf32> to vector<16x1xf32>
    %cst_39 = arith.constant 3.200000e+01 : f32
    %118 = vector.broadcast %cst_39 : f32 to vector<16x1xf32>
    %119 = arith.divf %117, %118 : vector<16x1xf32>
    %120 = vector.broadcast %119 : vector<16x1xf32> to vector<16x32xf32>
    %121 = arith.subf %115, %120 : vector<16x32xf32>
    %122 = arith.mulf %121, %121 : vector<16x32xf32>
    %cst_40 = arith.constant dense<0.000000e+00> : vector<16xf32>
    %123 = vector.multi_reduction <add>, %122, %cst_40 [1] : vector<16x32xf32> to vector<16xf32>
    %124 = vector.shape_cast %123 : vector<16xf32> to vector<16x1xf32>
    %cst_41 = arith.constant 3.200000e+01 : f32
    %125 = vector.broadcast %cst_41 : f32 to vector<16x1xf32>
    %126 = arith.divf %124, %125 : vector<16x1xf32>
    %127 = vector.broadcast %119 : vector<16x1xf32> to vector<16x32xf32>
    %128 = arith.subf %115, %127 : vector<16x32xf32>
    %cst_42 = arith.constant 9.99999996E-13 : f32
    %129 = vector.broadcast %cst_42 : f32 to vector<16x1xf32>
    %130 = arith.addf %126, %129 : vector<16x1xf32>
    %131 = math.rsqrt %130 : vector<16x1xf32>
    %132 = vector.broadcast %131 : vector<16x1xf32> to vector<16x32xf32>
    %133 = arith.mulf %128, %132 : vector<16x32xf32>
    %134 = vector.broadcast %9 : vector<1x32xf32> to vector<16x32xf32>
    %135 = arith.mulf %133, %134 : vector<16x32xf32>
    %136 = vector.broadcast %10 : vector<1x32xf32> to vector<16x32xf32>
    %137 = arith.addf %135, %136 : vector<16x32xf32>
    %c0_43 = arith.constant 0 : index
    %c0_44 = arith.constant 0 : index
    %c0_45 = arith.constant 0 : index
    %138 = vector.load %arg4[%c0_43, %c0_44, %c0_45] : memref<2x32x64xf32, #tpu.memory_space<vmem>>, vector<1x32x64xf32>
    %139 = vector.shape_cast %138 : vector<1x32x64xf32> to vector<32x64xf32>
    %cst_46 = arith.constant dense<0.000000e+00> : vector<16x64xf32>
    %140 = tpu.matmul %137, %139, %cst_46 {dimension_numbers = #tpu.dot_dimension_numbers<[1], [0], [0], [1], [0, 0, 1, 1], [], []>} : vector<16x32xf32>, vector<32x64xf32>, vector<16x64xf32> -> vector<16x64xf32>
    %141 = vector.broadcast %12 : vector<1x64xf32> to vector<16x64xf32>
    %142 = arith.addf %140, %141 : vector<16x64xf32>
    %cst_47 = arith.constant 0.000000e+00 : f32
    %143 = vector.broadcast %cst_47 : f32 to vector<16x64xf32>
    %144 = arith.maximumf %142, %143 : vector<16x64xf32>
    %c1_48 = arith.constant 1 : index
    %c0_49 = arith.constant 0 : index
    %c0_50 = arith.constant 0 : index
    %145 = vector.load %arg4[%c1_48, %c0_49, %c0_50] : memref<2x32x64xf32, #tpu.memory_space<vmem>>, vector<1x32x64xf32>
    %146 = vector.shape_cast %145 : vector<1x32x64xf32> to vector<32x64xf32>
    %cst_51 = arith.constant dense<0.000000e+00> : vector<16x32xf32>
    %147 = tpu.matmul %144, %146, %cst_51 {dimension_numbers = #tpu.dot_dimension_numbers<[1], [1], [0], [0], [0, 0, 1, 0], [], []>} : vector<16x64xf32>, vector<32x64xf32>, vector<16x32xf32> -> vector<16x32xf32>
    %148 = vector.broadcast %13 : vector<1x32xf32> to vector<16x32xf32>
    %149 = arith.addf %147, %148 : vector<16x32xf32>
    %150 = arith.addf %115, %149 : vector<16x32xf32>
    %c0_52 = arith.constant 0 : index
    %c0_53 = arith.constant 0 : index
    %151 = vector.load %arg6[%c0_52, %c0_53] : memref<16x32xf32, #tpu.memory_space<vmem>>, vector<16x32xf32>
    tpu.vector_store %arg6[%c0_52, %c0_53], %150 {strides = array<i32>} : memref<16x32xf32, #tpu.memory_space<vmem>>, vector<16x32xf32>,
    return
  }
  func.func @transform_0(%arg0: i32) -> (i32, i32) {
    %c0_i32 = arith.constant 0 : i32
    %c0_i32_0 = arith.constant 0 : i32
    %c0_i32_1 = arith.constant 0 : i32
    return %c0_i32, %c0_i32_0 : i32, i32
  }
  func.func @transform_1(%arg0: i32) -> (i32, i32) {
    %c0_i32 = arith.constant 0 : i32
    %c0_i32_0 = arith.constant 0 : i32
    %c0_i32_1 = arith.constant 0 : i32
    return %c0_i32, %c0_i32_0 : i32, i32
  }
  func.func @transform_2(%arg0: i32) -> (i32, i32) {
    %c0_i32 = arith.constant 0 : i32
    %c0_i32_0 = arith.constant 0 : i32
    %c0_i32_1 = arith.constant 0 : i32
    return %c0_i32, %c0_i32_0 : i32, i32
  }
  func.func @transform_3(%arg0: i32) -> (i32, i32, i32) {
    %c0_i32 = arith.constant 0 : i32
    %c0_i32_0 = arith.constant 0 : i32
    %c0_i32_1 = arith.constant 0 : i32
    %c0_i32_2 = arith.constant 0 : i32
    return %c0_i32, %c0_i32_0, %c0_i32_1 : i32, i32, i32
  }
  func.func @transform_4(%arg0: i32) -> (i32, i32) {
    %c0_i32 = arith.constant 0 : i32
    %c0_i32_0 = arith.constant 0 : i32
    %c0_i32_1 = arith.constant 0 : i32
    return %c0_i32, %c0_i32_0 : i32, i32
  }
  func.func @transform_5(%arg0: i32) -> (i32, i32) {
    %c0_i32 = arith.constant 0 : i32
    %c0_i32_0 = arith.constant 0 : i32
    %c0_i32_1 = arith.constant 0 : i32
    return %c0_i32, %c0_i32_0 : i32, i32
  }
}

</mosaic_0001>

<llo_original>
// kernel: tpu_custom_call.1
$region0: #{tpu_custom_call.1}
  #allocation0 [shape = 'u32[]', space=smem, size = 0x4, offset = 0x4, fixed_abs, tag = 'smem constant byte address 0x4 - core index']
  #allocation1 [shape = 'u32[72,128]{1,0:T(1,128)}', space=vmem, size = 0x9000, scoped, tag = 'internal scratch']
  %s0 = inlined_call_operand.hbm [shape: f32[16,32], index: 0, kind: input, shape index: {}]
  %s1 = inlined_call_operand.hbm [shape: f32[16,16], index: 1, kind: input, shape index: {}]
  %s2 = inlined_call_operand.hbm [shape: f32[32,256], index: 2, kind: input, shape index: {}]
  %s3 = inlined_call_operand.hbm [shape: f32[2,32,64], index: 3, kind: input, shape index: {}]
  %s4 = inlined_call_operand.hbm [shape: f32[8,256], index: 4, kind: input, shape index: {}]
  %s5 = inlined_call_operand.hbm [shape: f32[16,32], index: 5, kind: output, shape index: {}]
  %s6 = sld [smem:[#allocation0]]
  $region50: #{tpu_custom_call.1} parent=0
    _
  %s8 = ssub.s32 1, %s6
  %s9 = scalar_select 0, %s8, %s6
  $region1: #{tpu_custom_call.1} parent=0
    #allocation2 [shape = 'u8[8192]{0}', space=vmem, size = 0x2000, scoped, tag = 'input window, operand 0, single buffered']
    #allocation3 [shape = 's32[1]{0}', space=sflag, size = 0x4, scoped, tag = 'scoped memory for tpu_custom_call.1']
    #allocation4 [shape = 's32[1]{0}', space=sflag, size = 0x4, scoped, tag = 'scoped memory for tpu_custom_call.1']
    #allocation5 [shape = 'u8[8192]{0}', space=vmem, size = 0x2000, scoped, tag = 'input window, operand 1, single buffered']
    #allocation6 [shape = 's32[1]{0}', space=sflag, size = 0x4, scoped, tag = 'scoped memory for tpu_custom_call.1']
    #allocation7 [shape = 'u8[32768]{0}', space=vmem, size = 0x8000, scoped, tag = 'input window, operand 2, single buffered']
    #allocation8 [shape = 'u8[32768]{0}', space=vmem, size = 0x8000, scoped, tag = 'input window, operand 3, single buffered']
    #allocation9 [shape = 's32[1]{0}', space=sflag, size = 0x4, scoped, tag = 'scoped memory for tpu_custom_call.1']
    #allocation10 [shape = 'u8[8192]{0}', space=vmem, size = 0x2000, scoped, tag = 'input window, operand 4, single buffered']
    #allocation11 [shape = 'u8[8192]{0}', space=vmem, size = 0x2000, scoped, tag = 'output window, operand 0, single buffered']
    %10 = vsyncpa [#allocation3], 0
    %11 = vsyncpa [#allocation6], 0
    %12 = vsyncpa [#allocation9], 0
    %13 = vsyncpa [#allocation4], 0
    // Predicated region
    $region2: #{tpu_custom_call.1} parent=1 // pred_check
      _
    $region3: #{tpu_custom_call.1} parent=1 // pred_check_branch
      %15 = sbr.rel (0) target = $region5
    $region4: #{tpu_custom_call.1} parent=1 // pred_region
      %17 = vsyncadd [#allocation3], 0
      %s18 = sshll.u32 %s0, 4
      %s19 = int_to_ptr.hbm [resolvable:$true] %s18
      %s20 = sshll.u32 [#allocation2], 4
      %s21 = int_to_ptr.vmem [resolvable:$true] %s20
      %26 = dma.hbm_to_vmem [thread:$0]  %s19, 256, %s21, [#allocation3], 128, 128, 8
    $region5: #{tpu_custom_call.1} parent=1 // pred_fallthru
      _
    // Predicated region
    $region6: #{tpu_custom_call.1} parent=1 // pred_check
      _
    $region7: #{tpu_custom_call.1} parent=1 // pred_check_branch
      %28 = sbr.rel (0) target = $region9
    $region8: #{tpu_custom_call.1} parent=1 // pred_region
      %30 = vsyncadd [#allocation6], 0
      %s31 = sshll.u32 %s1, 4
      %s32 = int_to_ptr.hbm [resolvable:$true] %s31
      %s33 = sshll.u32 [#allocation5], 4
      %s34 = int_to_ptr.vmem [resolvable:$true] %s33
      %39 = dma.hbm_to_vmem [thread:$0]  %s32, 256, %s34, [#allocation6], 128, 128, 8
    $region9: #{tpu_custom_call.1} parent=1 // pred_fallthru
      _
    // Predicated region
    $region10: #{tpu_custom_call.1} parent=1 // pred_check
      _
    $region11: #{tpu_custom_call.1} parent=1 // pred_check_branch
      %41 = sbr.rel (0) target = $region13
    $region12: #{tpu_custom_call.1} parent=1 // pred_region
      %43 = vsyncadd [#allocation6], 0
      %s44 = sshll.u32 %s2, 4
      %s45 = int_to_ptr.hbm [resolvable:$true] %s44
      %s46 = sshll.u32 [#allocation7], 4
      %s47 = int_to_ptr.vmem [resolvable:$true] %s46
      %52 = dma.hbm_to_vmem [thread:$0]  %s45, 1024, %s47, [#allocation6], 256, 256, 16
    $region13: #{tpu_custom_call.1} parent=1 // pred_fallthru
      _
    // Predicated region
    $region14: #{tpu_custom_call.1} parent=1 // pred_check
      _
    $region15: #{tpu_custom_call.1} parent=1 // pred_check_branch
      %54 = sbr.rel (0) target = $region17
    $region16: #{tpu_custom_call.1} parent=1 // pred_region
      %56 = vsyncadd [#allocation9], 0
      %s57 = sshll.u32 %s3, 4
      %s58 = int_to_ptr.hbm [resolvable:$true] %s57
      %s59 = sshll.u32 [#allocation8], 4
      %s60 = int_to_ptr.vmem [resolvable:$true] %s59
      %65 = dma.hbm_to_vmem [thread:$0]  %s58, 1024, %s60, [#allocation9], 128, 128, 8
    $region17: #{tpu_custom_call.1} parent=1 // pred_fallthru
      _
    // Predicated region
    $region18: #{tpu_custom_call.1} parent=1 // pred_check
      _
    $region19: #{tpu_custom_call.1} parent=1 // pred_check_branch
      %67 = sbr.rel (0) target = $region21
    $region20: #{tpu_custom_call.1} parent=1 // pred_region
      %69 = vsyncadd [#allocation9], 0
      %s71 = sshll.u32 %s4, 4
      %s72 = int_to_ptr.hbm [resolvable:$true] %s71
      %s73 = sshll.u32 [#allocation10], 4
      %s74 = int_to_ptr.vmem [resolvable:$true] %s73
      %76 = dma.hbm_to_vmem [thread:$0]  %s72, 256, %s74, [#allocation9]
    $region21: #{tpu_custom_call.1} parent=1 // pred_fallthru
      _
    // Predicated region
    $region22: #{tpu_custom_call.1} parent=1 // pred_check
      _
    $region23: #{tpu_custom_call.1} parent=1 // pred_check_branch
      %78 = sbr.rel (0) target = $region25
    $region24: #{tpu_custom_call.1} parent=1 // pred_region
      %80 = dma.done [#allocation3], 256
    $region25: #{tpu_custom_call.1} parent=1 // pred_fallthru
      _
    // Predicated region
    $region26: #{tpu_custom_call.1} parent=1 // pred_check
      _
    $region27: #{tpu_custom_call.1} parent=1 // pred_check_branch
      %82 = sbr.rel (0) target = $region29
    $region28: #{tpu_custom_call.1} parent=1 // pred_region
      %84 = dma.done [#allocation6], 256
    $region29: #{tpu_custom_call.1} parent=1 // pred_fallthru
      _
    // Predicated region
    $region30: #{tpu_custom_call.1} parent=1 // pred_check
      _
    $region31: #{tpu_custom_call.1} parent=1 // pred_check_branch
      %86 = sbr.rel (0) target = $region33
    $region32: #{tpu_custom_call.1} parent=1 // pred_region
      %88 = dma.done [#allocation6], 1024
    $region33: #{tpu_custom_call.1} parent=1 // pred_fallthru
      _
    // Predicated region
    $region34: #{tpu_custom_call.1} parent=1 // pred_check
      _
    $region35: #{tpu_custom_call.1} parent=1 // pred_check_branch
      %90 = sbr.rel (0) target = $region37
    $region36: #{tpu_custom_call.1} parent=1 // pred_region
      %92 = dma.done [#allocation9], 1024
    $region37: #{tpu_custom_call.1} parent=1 // pred_fallthru
      _
    // Predicated region
    $region38: #{tpu_custom_call.1} parent=1 // pred_check
      _
    $region39: #{tpu_custom_call.1} parent=1 // pred_check_branch
      %94 = sbr.rel (0) target = $region41
    $region40: #{tpu_custom_call.1} parent=1 // pred_region
      %96 = dma.done [#allocation9], 256
    $region41: #{tpu_custom_call.1} parent=1 // pred_fallthru
      _
    %v97 = vld [vmem:[#allocation2] sm:$0xff]
    %v98 = vld [vmem:[#allocation2 + $0x8] sm:$0xff]
    %v99 = vld [vmem:[#allocation5] sm:$0xff]
    %v100 = vld [vmem:[#allocation5 + $0x8] sm:$0xff]
    %v101 = vsub.f32 %v99, 1.0
    %v102 = vsub.f32 %v100, 1.0
    %v103 = vmul.f32 %v101, 1e+09
    %v104 = vmul.f32 %v102, 1e+09
    %v105 = vld [vmem:[#allocation10] ss:$8 sm:$0x3]
    %v106 = vld [vmem:[#allocation10 + $0x1] ss:$0 sm:$0xff]
    %v107 = vld [vmem:[#allocation10 + $0x2] ss:$0 sm:$0xff]
    %v108 = vld [vmem:[#allocation10 + $0x3] ss:$0 sm:$0xff]
    %v109 = vld [vmem:[#allocation10 + $0x4] ss:$0 sm:$0xff]
    %v110 = vld [vmem:[#allocation10 + $0x5] ss:$0 sm:$0xff]
    %v111 = vld [vmem:[#allocation10 + $0x6] ss:$0 sm:$0xff]
    %v112 = vld [vmem:[#allocation10 + $0x7] ss:$0 sm:$0xff]
    %vm113 = vcmask 261120
    %v114 = vsel %vm113, %v97, 0.0
    %115 = vadd.xlane.f32.xlu0 %v114
    %v116 = vpop.xlane.xlu0 %115
    %v117 = vsel %vm113, %v98, 0.0
    %118 = vadd.xlane.f32.xlu0 %v117
    %v119 = vpop.xlane.xlu0 %118
    %v120 = vrcp.pop 32.0
    %v121 = vmul.f32 32.0, %v120
    %v122 = vsub.f32 1.0, %v121
    %v123 = vmul.f32 %v120, %v122
    %v124 = vadd.f32 %v120, %v123
    %vm125 = vweird.f32 %v120
    %v126 = vsel %vm125, %v120, %v124
    %v127 = vmul.f32 %v116, %v126
    %v128 = vmul.f32 %v119, %v126
    %v129 = vsub.f32 %v97, %v127
    %v130 = vsub.f32 %v98, %v128
    %v131 = vmul.f32 %v129, %v129
    %v132 = vmul.f32 %v130, %v130
    %v133 = vsel %vm113, %v131, 0.0
    %134 = vadd.xlane.f32.xlu0 %v133
    %v135 = vpop.xlane.xlu0 %134
    %v136 = vsel %vm113, %v132, 0.0
    %137 = vadd.xlane.f32.xlu0 %v136
    %v138 = vpop.xlane.xlu0 %137
    %v139 = vmul.f32 %v135, %v126
    %v140 = vmul.f32 %v138, %v126
    %v141 = vadd.f32 %v139, 1e-12
    %v142 = vadd.f32 %v140, 1e-12
    %v143 = vrsqrt.pop %v141
    %v144 = vmul.f32 %v143, %v141
    %v145 = vmul.f32 %v144, %v143
    %v146 = vmul.f32 0.5, %v145
    %v147 = vsub.f32 1.5, %v146
    %v148 = vmul.f32 %v143, %v147
    %vm149 = vweird.f32 %v141
    %vm150 = vweird.f32 %v143
    %vm151 = vmor %vm149, %vm150
    %v152 = vsel %vm151, %v143, %v148
    %v153 = vrsqrt.pop %v142
    %v154 = vmul.f32 %v153, %v142
    %v155 = vmul.f32 %v154, %v153
    %v156 = vmul.f32 0.5, %v155
    %v157 = vsub.f32 1.5, %v156
    %v158 = vmul.f32 %v153, %v157
    %vm159 = vweird.f32 %v142
    %vm160 = vweird.f32 %v153
    %vm161 = vmor %vm159, %vm160
    %v162 = vsel %vm161, %v153, %v158
    %v163 = vmul.f32 %v129, %v152
    %v164 = vmul.f32 %v130, %v162
    %v165 = vmul.f32 %v163, %v106
    %v166 = vmul.f32 %v164, %v106
    %v167 = vadd.f32 %v165, %v107
    %v168 = vadd.f32 %v166, %v107
    %v169 = vld [vmem:[#allocation7] sm:$0xff]
    %v170 = vld [vmem:[#allocation7 + $0x8] sm:$0xff]
    %v171 = vld [vmem:[#allocation7 + $0x10] sm:$0xff]
    %v172 = vld [vmem:[#allocation7 + $0x18] sm:$0xff]
    %v173 = vld [vmem:[#allocation7 + $0x20] sm:$0xff]
    %v174 = vld [vmem:[#allocation7 + $0x28] sm:$0xff]
    %v175 = vld [vmem:[#allocation7 + $0x30] sm:$0xff]
    %v176 = vld [vmem:[#allocation7 + $0x38] sm:$0xff]
    %v178 = vperm.slane %v105, 0
    %v179 = vperm.slane %v105, 1
    %v183 = vsel %vm113, %v167, 0
    %v186 = vsel %vm113, %v168, 0
    %188 = vmatpush.msra.mxu0 0.0
    %189 = vmatpush.msra.mxu0 0.0
    %190 = vmatpush.msra.mxu0 0.0
    %191 = vmatpush.msra.mxu0 0.0
    %192 = vmatpush.msra.mxu0 0.0
    %193 = vmatpush.msra.mxu0 0.0
    %194 = vmatpush.msra.mxu0 0.0
    %195 = vmatpush.msra.mxu0 0.0
    %196 = vmatpush.msra.mxu0 0.0
    %197 = vmatpush.msra.mxu0 0.0
    %198 = vmatpush.msra.mxu0 0.0
    %199 = vmatpush.msra.mxu0 0.0
    %200 = vmatpush.msra.mxu0 %v175
    %201 = vmatpush.msra.mxu0 %v173
    %202 = vmatpush.msra.mxu0 %v171
    %203 = vmatpush.msra.mxu0 %v169
    %204 = vmatmul.f32.gmra.mxu0 %v183
    %v205 = vpop.f32.mrf.mxu0
    %v206 = vadd.f32 %v178, %v205
    %207 = vmatmul.f32.gmra.mxu0 %v186
    %v208 = vpop.f32.mrf.mxu0
    %v209 = vadd.f32 %v178, %v208
    %210 = vdwg.mxu0
    %211 = vmatpush.msra.mxu0 0.0
    %212 = vmatpush.msra.mxu0 0.0
    %213 = vmatpush.msra.mxu0 0.0
    %214 = vmatpush.msra.mxu0 0.0
    %215 = vmatpush.msra.mxu0 0.0
    %216 = vmatpush.msra.mxu0 0.0
    %217 = vmatpush.msra.mxu0 0.0
    %218 = vmatpush.msra.mxu0 0.0
    %219 = vmatpush.msra.mxu0 0.0
    %220 = vmatpush.msra.mxu0 0.0
    %221 = vmatpush.msra.mxu0 0.0
    %222 = vmatpush.msra.mxu0 0.0
    %223 = vmatpush.msra.mxu0 %v176
    %224 = vmatpush.msra.mxu0 %v174
    %225 = vmatpush.msra.mxu0 %v172
    %226 = vmatpush.msra.mxu0 %v170
    %227 = vmatmul.f32.gmra.mxu0 %v183
    %v228 = vpop.f32.mrf.mxu0
    %v229 = vadd.f32 %v179, %v228
    %230 = vmatmul.f32.gmra.mxu0 %v186
    %v231 = vpop.f32.mrf.mxu0
    %v232 = vadd.f32 %v179, %v231
    %233 = vdwg.mxu0
    %236 = vrot.lane.b32.xlu0 %v206, 96
    %v237 = vpop.permute.xlu0 %236
    %238 = vrot.lane.b32.xlu0 %v209, 96
    %v239 = vpop.permute.xlu0 %238
    %vm240 = vcmask 64512
    %v241 = vsel %vm240, %v206, 0
    %v243 = vsel %vm240, %v209, 0
    %v245 = vsel %vm240, %v237, 0
    %v247 = vsel %vm240, %v239, 0
    %249 = vmatpush.xpose.msra.mxu0 0.0
    %250 = vmatpush.xpose.msra.mxu0 0.0
    %251 = vmatpush.xpose.msra.mxu0 0.0
    %252 = vmatpush.xpose.msra.mxu0 0.0
    %253 = vmatpush.xpose.msra.mxu0 0.0
    %254 = vmatpush.xpose.msra.mxu0 0.0
    %255 = vmatpush.xpose.msra.mxu0 0.0
    %256 = vmatpush.xpose.msra.mxu0 0.0
    %257 = vmatpush.xpose.msra.mxu0 0.0
    %258 = vmatpush.xpose.msra.mxu0 0.0
    %259 = vmatpush.xpose.msra.mxu0 0.0
    %260 = vmatpush.xpose.msra.mxu0 0.0
    %261 = vmatpush.xpose.msra.mxu0 0.0
    %262 = vmatpush.xpose.msra.mxu0 0.0
    %263 = vmatpush.xpose.msra.mxu0 %v247
    %264 = vmatpush.xpose.msra.mxu0 %v245
    %265 = vmatmul.f32.gmra.mxu0 %v241
    %v266 = vpop.f32.mrf.mxu0
    %v267 = vadd.f32 %v103, %v266
    %268 = vmatmul.f32.gmra.mxu0 %v243
    %v269 = vpop.f32.mrf.mxu0
    %v270 = vadd.f32 %v104, %v269
    %271 = vdwg.mxu0
    %vm272 = vcmask 130048
    %v273 = vsel %vm272, %v267, -inf
    %274 = vmax.xlane.f32.xlu0 %v273
    %v275 = vpop.xlane.xlu0 %274
    %v276 = vsel %vm272, %v270, -inf
    %277 = vmax.xlane.f32.xlu0 %v276
    %v278 = vpop.xlane.xlu0 %277
    %v279 = vsub.f32 %v267, %v275
    %v280 = vsub.f32 %v270, %v278
    %v281 = vmul.f32 %v279, 1.442695
    %v282 = vpow.pop %v281
    %v283 = vmul.f32 %v280, 1.442695
    %v284 = vpow.pop %v283
    %v285 = vsel %vm272, %v282, 0.0
    %286 = vadd.xlane.f32.xlu0 %v285
    %v287 = vpop.xlane.xlu0 %286
    %v288 = vsel %vm272, %v284, 0.0
    %289 = vadd.xlane.f32.xlu0 %v288
    %v290 = vpop.xlane.xlu0 %289
    %v291 = vrcp.pop %v287
    %v292 = vrcp.pop %v290
    %v293 = vmul.f32 %v282, %v291
    %v294 = vmul.f32 %v284, %v292
    %v295 = vmul.f32 %v293, %v99
    %v296 = vmul.f32 %v294, %v100
    %297 = vrot.lane.b32.xlu0 %v206, 120
    %v298 = vpop.permute.xlu0 %297
    %299 = vrot.lane.b32.xlu0 %v209, 120
    %v300 = vpop.permute.xlu0 %299
    %301 = vrot.lane.b32.xlu0 %v206, 88
    %v302 = vpop.permute.xlu0 %301
    %303 = vrot.lane.b32.xlu0 %v209, 88
    %v304 = vpop.permute.xlu0 %303
    %v305 = vsel %vm240, %v298, 0
    %v307 = vsel %vm240, %v300, 0
    %v309 = vsel %vm240, %v302, 0
    %v311 = vsel %vm240, %v304, 0
    %313 = vmatpush.xpose.msra.mxu0 0.0
    %314 = vmatpush.xpose.msra.mxu0 0.0
    %315 = vmatpush.xpose.msra.mxu0 0.0
    %316 = vmatpush.xpose.msra.mxu0 0.0
    %317 = vmatpush.xpose.msra.mxu0 0.0
    %318 = vmatpush.xpose.msra.mxu0 0.0
    %319 = vmatpush.xpose.msra.mxu0 0.0
    %320 = vmatpush.xpose.msra.mxu0 0.0
    %321 = vmatpush.xpose.msra.mxu0 0.0
    %322 = vmatpush.xpose.msra.mxu0 0.0
    %323 = vmatpush.xpose.msra.mxu0 0.0
    %324 = vmatpush.xpose.msra.mxu0 0.0
    %325 = vmatpush.xpose.msra.mxu0 0.0
    %326 = vmatpush.xpose.msra.mxu0 0.0
    %327 = vmatpush.xpose.msra.mxu0 %v311
    %328 = vmatpush.xpose.msra.mxu0 %v309
    %329 = vmatmul.f32.gmra.mxu0 %v305
    %v330 = vpop.f32.mrf.mxu0
    %v331 = vadd.f32 %v103, %v330
    %332 = vmatmul.f32.gmra.mxu0 %v307
    %v333 = vpop.f32.mrf.mxu0
    %v334 = vadd.f32 %v104, %v333
    %335 = vdwg.mxu0
    %v336 = vsel %vm272, %v331, -inf
    %337 = vmax.xlane.f32.xlu0 %v336
    %v338 = vpop.xlane.xlu0 %337
    %v339 = vsel %vm272, %v334, -inf
    %340 = vmax.xlane.f32.xlu0 %v339
    %v341 = vpop.xlane.xlu0 %340
    %v342 = vsub.f32 %v331, %v338
    %v343 = vsub.f32 %v334, %v341
    %v344 = vmul.f32 %v342, 1.442695
    %v345 = vpow.pop %v344
    %v346 = vmul.f32 %v343, 1.442695
    %v347 = vpow.pop %v346
    %v348 = vsel %vm272, %v345, 0.0
    %349 = vadd.xlane.f32.xlu0 %v348
    %v350 = vpop.xlane.xlu0 %349
    %v351 = vsel %vm272, %v347, 0.0
    %352 = vadd.xlane.f32.xlu0 %v351
    %v353 = vpop.xlane.xlu0 %352
    %v354 = vrcp.pop %v350
    %v355 = vrcp.pop %v353
    %v356 = vmul.f32 %v345, %v354
    %v357 = vmul.f32 %v347, %v355
    %v358 = vmul.f32 %v356, %v99
    %v359 = vmul.f32 %v357, %v100
    %362 = vrot.lane.b32.xlu0 %v229, 96
    %v363 = vpop.permute.xlu0 %362
    %364 = vrot.lane.b32.xlu0 %v232, 96
    %v365 = vpop.permute.xlu0 %364
    %v369 = vsel %vm272, %v358, 0
    %v372 = vsel %vm272, %v359, 0
    %374 = vmatpush.msra.mxu0 0.0
    %375 = vmatpush.msra.mxu0 0.0
    %376 = vmatpush.msra.mxu0 0.0
    %377 = vmatpush.msra.mxu0 0.0
    %378 = vmatpush.msra.mxu0 0.0
    %379 = vmatpush.msra.mxu0 0.0
    %380 = vmatpush.msra.mxu0 0.0
    %381 = vmatpush.msra.mxu0 0.0
    %382 = vmatpush.msra.mxu0 0.0
    %383 = vmatpush.msra.mxu0 0.0
    %384 = vmatpush.msra.mxu0 0.0
    %385 = vmatpush.msra.mxu0 0.0
    %386 = vmatpush.msra.mxu0 0.0
    %387 = vmatpush.msra.mxu0 0.0
    %388 = vmatpush.msra.mxu0 %v365
    %389 = vmatpush.msra.mxu0 %v363
    %390 = vmatmul.f32.gmra.mxu0 %v369
    %v391 = vpop.f32.mrf.mxu0
    %v392 = vadd.f32 0.0, %v391
    %393 = vmatmul.f32.gmra.mxu0 %v372
    %v394 = vpop.f32.mrf.mxu0
    %v395 = vadd.f32 0.0, %v394
    %396 = vdwg.mxu0
    %v398 = vsel %vm272, %v295, 0
    %v401 = vsel %vm272, %v296, 0
    %403 = vmatpush.msra.mxu0 0.0
    %404 = vmatpush.msra.mxu0 0.0
    %405 = vmatpush.msra.mxu0 0.0
    %406 = vmatpush.msra.mxu0 0.0
    %407 = vmatpush.msra.mxu0 0.0
    %408 = vmatpush.msra.mxu0 0.0
    %409 = vmatpush.msra.mxu0 0.0
    %410 = vmatpush.msra.mxu0 0.0
    %411 = vmatpush.msra.mxu0 0.0
    %412 = vmatpush.msra.mxu0 0.0
    %413 = vmatpush.msra.mxu0 0.0
    %414 = vmatpush.msra.mxu0 0.0
    %415 = vmatpush.msra.mxu0 0.0
    %416 = vmatpush.msra.mxu0 0.0
    %417 = vmatpush.msra.mxu0 %v232
    %418 = vmatpush.msra.mxu0 %v229
    %419 = vmatmul.f32.gmra.mxu0 %v398
    %v420 = vpop.f32.mrf.mxu0
    %v421 = vadd.f32 %v392, %v420
    %422 = vmatmul.f32.gmra.mxu0 %v401
    %v423 = vpop.f32.mrf.mxu0
    %v424 = vadd.f32 %v395, %v423
    %425 = vdwg.mxu0
    %426 = vrot.lane.b32.xlu0 %v206, 112
    %v427 = vpop.permute.xlu0 %426
    %428 = vrot.lane.b32.xlu0 %v209, 112
    %v429 = vpop.permute.xlu0 %428
    %430 = vrot.lane.b32.xlu0 %v206, 80
    %v431 = vpop.permute.xlu0 %430
    %432 = vrot.lane.b32.xlu0 %v209, 80
    %v433 = vpop.permute.xlu0 %432
    %v434 = vsel %vm240, %v427, 0
    %v436 = vsel %vm240, %v429, 0
    %v438 = vsel %vm240, %v431, 0
    %v440 = vsel %vm240, %v433, 0
    %442 = vmatpush.xpose.msra.mxu0 0.0
    %443 = vmatpush.xpose.msra.mxu0 0.0
    %444 = vmatpush.xpose.msra.mxu0 0.0
    %445 = vmatpush.xpose.msra.mxu0 0.0
    %446 = vmatpush.xpose.msra.mxu0 0.0
    %447 = vmatpush.xpose.msra.mxu0 0.0
    %448 = vmatpush.xpose.msra.mxu0 0.0
    %449 = vmatpush.xpose.msra.mxu0 0.0
    %450 = vmatpush.xpose.msra.mxu0 0.0
    %451 = vmatpush.xpose.msra.mxu0 0.0
    %452 = vmatpush.xpose.msra.mxu0 0.0
    %453 = vmatpush.xpose.msra.mxu0 0.0
    %454 = vmatpush.xpose.msra.mxu0 0.0
    %455 = vmatpush.xpose.msra.mxu0 0.0
    %456 = vmatpush.xpose.msra.mxu0 %v440
    %457 = vmatpush.xpose.msra.mxu0 %v438
    %458 = vmatmul.f32.gmra.mxu0 %v434
    %v459 = vpop.f32.mrf.mxu0
    %v460 = vadd.f32 %v103, %v459
    %461 = vmatmul.f32.gmra.mxu0 %v436
    %v462 = vpop.f32.mrf.mxu0
    %v463 = vadd.f32 %v104, %v462
    %464 = vdwg.mxu0
    %v465 = vsel %vm272, %v460, -inf
    %466 = vmax.xlane.f32.xlu0 %v465
    %v467 = vpop.xlane.xlu0 %466
    %v468 = vsel %vm272, %v463, -inf
    %469 = vmax.xlane.f32.xlu0 %v468
    %v470 = vpop.xlane.xlu0 %469
    %v471 = vsub.f32 %v460, %v467
    %v472 = vsub.f32 %v463, %v470
    %v473 = vmul.f32 %v471, 1.442695
    %v474 = vpow.pop %v473
    %v475 = vmul.f32 %v472, 1.442695
    %v476 = vpow.pop %v475
    %v477 = vsel %vm272, %v474, 0.0
    %478 = vadd.xlane.f32.xlu0 %v477
    %v479 = vpop.xlane.xlu0 %478
    %v480 = vsel %vm272, %v476, 0.0
    %481 = vadd.xlane.f32.xlu0 %v480
    %v482 = vpop.xlane.xlu0 %481
    %v483 = vrcp.pop %v479
    %v484 = vrcp.pop %v482
    %v485 = vmul.f32 %v474, %v483
    %v486 = vmul.f32 %v476, %v484
    %v487 = vmul.f32 %v485, %v99
    %v488 = vmul.f32 %v486, %v100
    %489 = vrot.lane.b32.xlu0 %v229, 64
    %v490 = vpop.permute.xlu0 %489
    %491 = vrot.lane.b32.xlu0 %v232, 64
    %v492 = vpop.permute.xlu0 %491
    %v496 = vsel %vm272, %v487, 0
    %v499 = vsel %vm272, %v488, 0
    %501 = vmatpush.msra.mxu0 0.0
    %502 = vmatpush.msra.mxu0 0.0
    %503 = vmatpush.msra.mxu0 0.0
    %504 = vmatpush.msra.mxu0 0.0
    %505 = vmatpush.msra.mxu0 0.0
    %506 = vmatpush.msra.mxu0 0.0
    %507 = vmatpush.msra.mxu0 0.0
    %508 = vmatpush.msra.mxu0 0.0
    %509 = vmatpush.msra.mxu0 0.0
    %510 = vmatpush.msra.mxu0 0.0
    %511 = vmatpush.msra.mxu0 0.0
    %512 = vmatpush.msra.mxu0 0.0
    %513 = vmatpush.msra.mxu0 0.0
    %514 = vmatpush.msra.mxu0 0.0
    %515 = vmatpush.msra.mxu0 %v492
    %516 = vmatpush.msra.mxu0 %v490
    %517 = vmatmul.f32.gmra.mxu0 %v496
    %v518 = vpop.f32.mrf.mxu0
    %v519 = vadd.f32 0.0, %v518
    %520 = vmatmul.f32.gmra.mxu0 %v499
    %v521 = vpop.f32.mrf.mxu0
    %v522 = vadd.f32 0.0, %v521
    %523 = vdwg.mxu0
    %v524 = vadd.f32 %v421, %v519
    %v525 = vadd.f32 %v424, %v522
    %526 = vrot.lane.b32.xlu0 %v206, 104
    %v527 = vpop.permute.xlu0 %526
    %528 = vrot.lane.b32.xlu0 %v209, 104
    %v529 = vpop.permute.xlu0 %528
    %530 = vrot.lane.b32.xlu0 %v206, 72
    %v531 = vpop.permute.xlu0 %530
    %532 = vrot.lane.b32.xlu0 %v209, 72
    %v533 = vpop.permute.xlu0 %532
    %v534 = vsel %vm240, %v527, 0
    %v536 = vsel %vm240, %v529, 0
    %v538 = vsel %vm240, %v531, 0
    %v540 = vsel %vm240, %v533, 0
    %542 = vmatpush.xpose.msra.mxu0 0.0
    %543 = vmatpush.xpose.msra.mxu0 0.0
    %544 = vmatpush.xpose.msra.mxu0 0.0
    %545 = vmatpush.xpose.msra.mxu0 0.0
    %546 = vmatpush.xpose.msra.mxu0 0.0
    %547 = vmatpush.xpose.msra.mxu0 0.0
    %548 = vmatpush.xpose.msra.mxu0 0.0
    %549 = vmatpush.xpose.msra.mxu0 0.0
    %550 = vmatpush.xpose.msra.mxu0 0.0
    %551 = vmatpush.xpose.msra.mxu0 0.0
    %552 = vmatpush.xpose.msra.mxu0 0.0
    %553 = vmatpush.xpose.msra.mxu0 0.0
    %554 = vmatpush.xpose.msra.mxu0 0.0
    %555 = vmatpush.xpose.msra.mxu0 0.0
    %556 = vmatpush.xpose.msra.mxu0 %v540
    %557 = vmatpush.xpose.msra.mxu0 %v538
    %558 = vmatmul.f32.gmra.mxu0 %v534
    %v559 = vpop.f32.mrf.mxu0
    %v560 = vadd.f32 %v103, %v559
    %561 = vmatmul.f32.gmra.mxu0 %v536
    %v562 = vpop.f32.mrf.mxu0
    %v563 = vadd.f32 %v104, %v562
    %564 = vdwg.mxu0
    %v565 = vsel %vm272, %v560, -inf
    %566 = vmax.xlane.f32.xlu0 %v565
    %v567 = vpop.xlane.xlu0 %566
    %v568 = vsel %vm272, %v563, -inf
    %569 = vmax.xlane.f32.xlu0 %v568
    %v570 = vpop.xlane.xlu0 %569
    %v571 = vsub.f32 %v560, %v567
    %v572 = vsub.f32 %v563, %v570
    %v573 = vmul.f32 %v571, 1.442695
    %v574 = vpow.pop %v573
    %v575 = vmul.f32 %v572, 1.442695
    %v576 = vpow.pop %v575
    %v577 = vsel %vm272, %v574, 0.0
    %578 = vadd.xlane.f32.xlu0 %v577
    %v579 = vpop.xlane.xlu0 %578
    %v580 = vsel %vm272, %v576, 0.0
    %581 = vadd.xlane.f32.xlu0 %v580
    %v582 = vpop.xlane.xlu0 %581
    %v583 = vrcp.pop %v579
    %v584 = vrcp.pop %v582
    %v585 = vmul.f32 %v574, %v583
    %v586 = vmul.f32 %v576, %v584
    %v587 = vmul.f32 %v585, %v99
    %v588 = vmul.f32 %v586, %v100
    %589 = vrot.lane.b32.xlu0 %v229, 32
    %v590 = vpop.permute.xlu0 %589
    %591 = vrot.lane.b32.xlu0 %v232, 32
    %v592 = vpop.permute.xlu0 %591
    %v596 = vsel %vm272, %v587, 0
    %v599 = vsel %vm272, %v588, 0
    %601 = vmatpush.msra.mxu0 0.0
    %602 = vmatpush.msra.mxu0 0.0
    %603 = vmatpush.msra.mxu0 0.0
    %604 = vmatpush.msra.mxu0 0.0
    %605 = vmatpush.msra.mxu0 0.0
    %606 = vmatpush.msra.mxu0 0.0
    %607 = vmatpush.msra.mxu0 0.0
    %608 = vmatpush.msra.mxu0 0.0
    %609 = vmatpush.msra.mxu0 0.0
    %610 = vmatpush.msra.mxu0 0.0
    %611 = vmatpush.msra.mxu0 0.0
    %612 = vmatpush.msra.mxu0 0.0
    %613 = vmatpush.msra.mxu0 0.0
    %614 = vmatpush.msra.mxu0 0.0
    %615 = vmatpush.msra.mxu0 %v592
    %616 = vmatpush.msra.mxu0 %v590
    %617 = vmatmul.f32.gmra.mxu0 %v596
    %v618 = vpop.f32.mrf.mxu0
    %v619 = vadd.f32 0.0, %v618
    %620 = vmatmul.f32.gmra.mxu0 %v599
    %v621 = vpop.f32.mrf.mxu0
    %v622 = vadd.f32 0.0, %v621
    %623 = vdwg.mxu0
    %v624 = vadd.f32 %v524, %v619
    %v625 = vadd.f32 %v525, %v622
    %v626 = vadd.f32 %v97, %v624
    %v627 = vadd.f32 %v98, %v625
    %v628 = vadd.f32 %v626, %v110
    %v629 = vadd.f32 %v627, %v110
    %v630 = vsel %vm113, %v628, 0.0
    %631 = vadd.xlane.f32.xlu0 %v630
    %v632 = vpop.xlane.xlu0 %631
    %v633 = vsel %vm113, %v629, 0.0
    %634 = vadd.xlane.f32.xlu0 %v633
    %v635 = vpop.xlane.xlu0 %634
    %v636 = vmul.f32 %v632, %v126
    %v637 = vmul.f32 %v635, %v126
    %v638 = vsub.f32 %v628, %v636
    %v639 = vsub.f32 %v629, %v637
    %v640 = vmul.f32 %v638, %v638
    %v641 = vmul.f32 %v639, %v639
    %v642 = vsel %vm113, %v640, 0.0
    %643 = vadd.xlane.f32.xlu0 %v642
    %v644 = vpop.xlane.xlu0 %643
    %v645 = vsel %vm113, %v641, 0.0
    %646 = vadd.xlane.f32.xlu0 %v645
    %v647 = vpop.xlane.xlu0 %646
    %v648 = vmul.f32 %v644, %v126
    %v649 = vmul.f32 %v647, %v126
    %v650 = vadd.f32 %v648, 1e-12
    %v651 = vadd.f32 %v649, 1e-12
    %v652 = vrsqrt.pop %v650
    %v653 = vmul.f32 %v652, %v650
    %v654 = vmul.f32 %v653, %v652
    %v655 = vmul.f32 0.5, %v654
    %v656 = vsub.f32 1.5, %v655
    %v657 = vmul.f32 %v652, %v656
    %vm658 = vweird.f32 %v650
    %vm659 = vweird.f32 %v652
    %vm660 = vmor %vm658, %vm659
    %v661 = vsel %vm660, %v652, %v657
    %v662 = vrsqrt.pop %v651
    %v663 = vmul.f32 %v662, %v651
    %v664 = vmul.f32 %v663, %v662
    %v665 = vmul.f32 0.5, %v664
    %v666 = vsub.f32 1.5, %v665
    %v667 = vmul.f32 %v662, %v666
    %vm668 = vweird.f32 %v651
    %vm669 = vweird.f32 %v662
    %vm670 = vmor %vm668, %vm669
    %v671 = vsel %vm670, %v662, %v667
    %v672 = vmul.f32 %v638, %v661
    %v673 = vmul.f32 %v639, %v671
    %v674 = vmul.f32 %v672, %v108
    %v675 = vmul.f32 %v673, %v108
    %v676 = vadd.f32 %v674, %v109
    %v677 = vadd.f32 %v675, %v109
    %v678 = vld [vmem:[#allocation8] sm:$0xff]
    %v679 = vld [vmem:[#allocation8 + $0x8] sm:$0xff]
    %v680 = vld [vmem:[#allocation8 + $0x10] sm:$0xff]
    %v681 = vld [vmem:[#allocation8 + $0x18] sm:$0xff]
    %v683 = vsel %vm113, %v676, 0
    %v686 = vsel %vm113, %v677, 0
    %688 = vmatpush.msra.mxu0 0.0
    %689 = vmatpush.msra.mxu0 0.0
    %690 = vmatpush.msra.mxu0 0.0
    %691 = vmatpush.msra.mxu0 0.0
    %692 = vmatpush.msra.mxu0 0.0
    %693 = vmatpush.msra.mxu0 0.0
    %694 = vmatpush.msra.mxu0 0.0
    %695 = vmatpush.msra.mxu0 0.0
    %696 = vmatpush.msra.mxu0 0.0
    %697 = vmatpush.msra.mxu0 0.0
    %698 = vmatpush.msra.mxu0 0.0
    %699 = vmatpush.msra.mxu0 0.0
    %700 = vmatpush.msra.mxu0 %v681
    %701 = vmatpush.msra.mxu0 %v680
    %702 = vmatpush.msra.mxu0 %v679
    %703 = vmatpush.msra.mxu0 %v678
    %704 = vmatmul.f32.gmra.mxu0 %v683
    %v705 = vpop.f32.mrf.mxu0
    %v706 = vadd.f32 %v111, %v705
    %707 = vmatmul.f32.gmra.mxu0 %v686
    %v708 = vpop.f32.mrf.mxu0
    %v709 = vadd.f32 %v111, %v708
    %710 = vdwg.mxu0
    %v711 = vmax.f32 %v706, 0.0
    %v712 = vmax.f32 %v709, 0.0
    %s713 = scalar_lea.vmem [#allocation8], 32
    %v714 = vld [vmem:[%s713] sm:$0xff]
    %v715 = vld [vmem:[%s713 + $0x8] sm:$0xff]
    %v716 = vld [vmem:[%s713 + $0x10] sm:$0xff]
    %v717 = vld [vmem:[%s713 + $0x18] sm:$0xff]
    %vm718 = vcmask 523264
    %v720 = vsel %vm718, %v711, 0
    %v723 = vsel %vm718, %v712, 0
    %v726 = vsel %vm718, %v714, 0
    %v729 = vsel %vm718, %v715, 0
    %v732 = vsel %vm718, %v716, 0
    %v735 = vsel %vm718, %v717, 0
    %737 = vmatpush.xpose.msra.mxu0 0.0
    %738 = vmatpush.xpose.msra.mxu0 0.0
    %739 = vmatpush.xpose.msra.mxu0 0.0
    %740 = vmatpush.xpose.msra.mxu0 0.0
    %741 = vmatpush.xpose.msra.mxu0 0.0
    %742 = vmatpush.xpose.msra.mxu0 0.0
    %743 = vmatpush.xpose.msra.mxu0 0.0
    %744 = vmatpush.xpose.msra.mxu0 0.0
    %745 = vmatpush.xpose.msra.mxu0 0.0
    %746 = vmatpush.xpose.msra.mxu0 0.0
    %747 = vmatpush.xpose.msra.mxu0 0.0
    %748 = vmatpush.xpose.msra.mxu0 0.0
    %749 = vmatpush.xpose.msra.mxu0 %v735
    %750 = vmatpush.xpose.msra.mxu0 %v732
    %751 = vmatpush.xpose.msra.mxu0 %v729
    %752 = vmatpush.xpose.msra.mxu0 %v726
    %753 = vmatmul.f32.gmra.mxu0 %v720
    %v754 = vpop.f32.mrf.mxu0
    %v755 = vadd.f32 %v112, %v754
    %756 = vmatmul.f32.gmra.mxu0 %v723
    %v757 = vpop.f32.mrf.mxu0
    %v758 = vadd.f32 %v112, %v757
    %759 = vdwg.mxu0
    %v760 = vadd.f32 %v628, %v755
    %v761 = vadd.f32 %v629, %v758
    %762 = vst.msk [vmem:[#allocation11] sm:$0xff] %vm113, %v760
    %763 = vst.msk [vmem:[#allocation11 + $0x8] sm:$0xff] %vm113, %v761
    // Predicated region
    $region42: #{tpu_custom_call.1} parent=1 // pred_check
      _
    $region43: #{tpu_custom_call.1} parent=1 // pred_check_branch
      %765 = sbr.rel (0) target = $region45
    $region44: #{tpu_custom_call.1} parent=1 // pred_region
      %767 = vsyncadd [#allocation4], 0
      %s768 = sshll.u32 [#allocation11], 4
      %s769 = int_to_ptr.vmem [resolvable:$true] %s768
      %s770 = sshll.u32 %s5, 4
      %s771 = int_to_ptr.hbm [resolvable:$true] %s770
      %776 = dma.vmem_to_hbm [thread:$0]  %s769, 256, %s771, [#allocation4], 128, 128, 8
    $region45: #{tpu_custom_call.1} parent=1 // pred_fallthru
      _
    // Predicated region
    $region46: #{tpu_custom_call.1} parent=1 // pred_check
      _
    $region47: #{tpu_custom_call.1} parent=1 // pred_check_branch
      %778 = sbr.rel (0) target = $region49
    $region48: #{tpu_custom_call.1} parent=1 // pred_region
      %780 = dma.done [#allocation4], 256
    $region49: #{tpu_custom_call.1} parent=1 // pred_fallthru
      _
    %781 = vsyncpa [#allocation3], 1
    %782 = vsyncpa [#allocation6], 1
    %783 = vsyncpa [#allocation9], 1
    %784 = vsyncpa [#allocation4], 1

</llo_original>
